<compile_context>
chip_gen: v5e
topology: v5e:2x2
jax: 0.10.0
libtpu: 0.0.40
codegen_flags: <defaults>
</compile_context>

<pallas_src>
import functools

import jax
import jax.numpy as jnp
from jax.experimental import pallas as pl
from jax.experimental.pallas import tpu as pltpu


def _round_up(n: int, m: int) -> int:
    return ((n + m - 1) // m) * m


def _fused_mlp_kernel(*refs, num_layers: int):
    """refs = (x, w0, b0, w1, b1, ..., w_{L-1}, b_{L-1}, out).

    x:  (Bp, F0p) f32   wi: (Fip, F(i+1)p) bf16   bi: (1, F(i+1)p) f32
    out:(Bp, FLp) f32
    """
    x_ref = refs[0]
    o_ref = refs[1 + 2 * num_layers]

    h = x_ref[...]                                   # f32 activation, stays on-chip
    for li in range(num_layers):                     # static unroll over fixed layer count
        w = refs[1 + 2 * li][...]                    # bf16 weight tile (MXU input)
        b = refs[2 + 2 * li][...]                    # (1, F_out) f32 bias
        y = jnp.dot(h.astype(jnp.bfloat16), w,
                    preferred_element_type=jnp.float32)
        y = y + b                                    # f32 epilogue (VPU)
        if li < num_layers - 1:                      # hidden blocks: act='relu'
            y = jnp.maximum(y, 0.0)
        h = y
    # TODO(synk): LinearBlock norm='bn'/'in', act='lrelu'/'tanh' and spectral-norm
    # variants are not instantiated by this MLP config and are not implemented.
    o_ref[...] = h.astype(o_ref.dtype)


def fused_mlp(x2d, params):
    """Run the whole MLP in one Pallas kernel.

    x2d:    (B, nf_in) f32, already flattened.
    params: list of (w, b); w: (f_in, f_out) f32 (PyTorch weight pre-transposed),
            b: (f_out,) f32.
    """
    B, nf_in = x2d.shape
    num_layers = len(params)
    dims = [nf_in] + [w.shape[1] for (w, _) in params]

    # Lane/sublane-dense padded sizes.
    b_pad = _round_up(B, 8)
    dims_pad = [_round_up(d, 128) for d in dims]

    # Zero-pad input (exact under zero-padded weights/biases).
    x_pad = jnp.zeros((b_pad, dims_pad[0]), jnp.float32).at[:B, :nf_in].set(x2d)

    flat_inputs = [x_pad]
    for li, (w, b) in enumerate(params):
        fi, fo = dims[li], dims[li + 1]
        fip, fop = dims_pad[li], dims_pad[li + 1]
        w_padded = jnp.zeros((fip, fop), jnp.bfloat16).at[:fi, :fo].set(
            w.astype(jnp.bfloat16))
        b_padded = jnp.zeros((1, fop), jnp.float32).at[0, :fo].set(b)
        flat_inputs += [w_padded, b_padded]

    flops = sum(2 * b_pad * dims_pad[i] * dims_pad[i + 1] for i in range(num_layers))
    bytes_accessed = sum(int(a.size) * a.dtype.itemsize for a in flat_inputs)
    bytes_accessed += b_pad * dims_pad[-1] * 4  # output writeback

    out_pad = pl.pallas_call(
        functools.partial(_fused_mlp_kernel, num_layers=num_layers),
        out_shape=jax.ShapeDtypeStruct((b_pad, dims_pad[-1]), jnp.float32),
        in_specs=[pl.BlockSpec(memory_space=pltpu.MemorySpace.VMEM)] * len(flat_inputs),
        out_specs=pl.BlockSpec(memory_space=pltpu.MemorySpace.VMEM),
        cost_estimate=pl.CostEstimate(flops=flops, transcendentals=0,
                                      bytes_accessed=bytes_accessed),
    )(*flat_inputs)

    # Slice padding off (batch rows and output lanes).
    return out_pad[:B, :dims[-1]]


def init_mlp_params(key, nf_in, nf_out, nf_mlp, num_blocks):
    """Deterministic init matching MLP.__init__ layer shapes (weights stored (in, out))."""
    dims = [nf_in] + [nf_mlp] * (num_blocks - 1) + [nf_out]
    params = []
    for li in range(num_blocks):
        fan_in, fan_out = dims[li], dims[li + 1]
        key, kw, kb = jax.random.split(key, 3)
        bound = 1.0 / jnp.sqrt(fan_in)
        w = jax.random.uniform(kw, (fan_in, fan_out), jnp.float32, -bound, bound)
        b = jax.random.uniform(kb, (fan_out,), jnp.float32, -bound, bound)
        params.append((w, b))
    return params


@jax.jit
def mlp_forward(x, params):
    """MLP.forward: flatten NCHW to (B, -1), then the fused LinearBlock stack."""
    B = x.shape[0]
    return fused_mlp(x.reshape(B, -1), params)


def mlp_reference_f32(x, params):
    """Pure-JAX f32 reference (PyTorch-equivalent math)."""
    B = x.shape[0]
    h = x.reshape(B, -1)
    n = len(params)
    for li, (w, b) in enumerate(params):
        h = h @ w + b
        if li < n - 1:
            h = jnp.maximum(h, 0.0)
    return h


def mlp_reference_bf16(x, params):
    """Pure-JAX reference matching the kernel's bf16-matmul / f32-accumulate numerics."""
    B = x.shape[0]
    h = x.reshape(B, -1).astype(jnp.float32)
    n = len(params)
    for li, (w, b) in enumerate(params):
        h = jnp.dot(h.astype(jnp.bfloat16), w.astype(jnp.bfloat16),
                    preferred_element_type=jnp.float32) + b
        if li < n - 1:
            h = jnp.maximum(h, 0.0)
    return h


if __name__ == "__main__":
    key = jax.random.PRNGKey(0)
    # Small NCHW-style input; flattened feature dim = 4*4*4 = 64.
    B, C, H, W = 8, 4, 4, 4
    nf_in = C * H * W          # 64  -> padded to 128 inside the wrapper
    nf_out = 32                # padded to 128, sliced back to 32
    nf_mlp = 128
    num_blocks = 3

    kx, kp = jax.random.split(key)
    x = jax.random.normal(kx, (B, C, H, W), jnp.float32)
    params = init_mlp_params(kp, nf_in, nf_out, nf_mlp, num_blocks)

    out = jax.block_until_ready(mlp_forward(x, params))
    assert out.shape == (B, nf_out)

    ref_bf16 = mlp_reference_bf16(x, params)
    ref_f32 = mlp_reference_f32(x, params)
    assert jnp.allclose(out, ref_bf16, atol=2e-3, rtol=2e-3), \
        float(jnp.max(jnp.abs(out - ref_bf16)))
    assert jnp.allclose(out, ref_f32, atol=5e-2, rtol=5e-2), \
        float(jnp.max(jnp.abs(out - ref_f32)))

    print("KERNEL_OK")
</pallas_src>

<mosaic_0001>
module attributes {stable_mosaic.version = 11 : i64} {
  func.func @_fused_mlp_kernel(%arg0: memref<8x128xf32, #tpu.memory_space<vmem>>, %arg1: memref<128x128xbf16, #tpu.memory_space<vmem>>, %arg2: memref<1x128xf32, #tpu.memory_space<vmem>>, %arg3: memref<128x128xbf16, #tpu.memory_space<vmem>>, %arg4: memref<1x128xf32, #tpu.memory_space<vmem>>, %arg5: memref<128x128xbf16, #tpu.memory_space<vmem>>, %arg6: memref<1x128xf32, #tpu.memory_space<vmem>>, %arg7: memref<8x128xf32, #tpu.memory_space<vmem>>) attributes {dimension_semantics = [], scalar_prefetch = 0 : i64, scratch_operands = 0 : i64, tpu.core_type = #tpu.core_type<tc>} {
    %c0 = arith.constant 0 : index
    %c0_0 = arith.constant 0 : index
    %0 = vector.load %arg0[%c0, %c0_0] : memref<8x128xf32, #tpu.memory_space<vmem>>, vector<8x128xf32>
    %c0_1 = arith.constant 0 : index
    %c0_2 = arith.constant 0 : index
    %1 = vector.load %arg1[%c0_1, %c0_2] : memref<128x128xbf16, #tpu.memory_space<vmem>>, vector<128x128xbf16>
    %c0_3 = arith.constant 0 : index
    %c0_4 = arith.constant 0 : index
    %2 = vector.load %arg2[%c0_3, %c0_4] : memref<1x128xf32, #tpu.memory_space<vmem>>, vector<1x128xf32>
    %3 = arith.truncf %0 : vector<8x128xf32> to vector<8x128xbf16>
    %cst = arith.constant dense<0.000000e+00> : vector<8x128xf32>
    %4 = tpu.matmul %3, %1, %cst {dimension_numbers = #tpu.dot_dimension_numbers<[1], [0], [0], [1], [0, 0, 1, 1], [], []>} : vector<8x128xbf16>, vector<128x128xbf16>, vector<8x128xf32> -> vector<8x128xf32>
    %5 = vector.broadcast %2 : vector<1x128xf32> to vector<8x128xf32>
    %6 = arith.addf %4, %5 : vector<8x128xf32>
    %cst_5 = arith.constant 0.000000e+00 : f32
    %7 = vector.broadcast %cst_5 : f32 to vector<8x128xf32>
    %8 = arith.maximumf %6, %7 : vector<8x128xf32>
    %c0_6 = arith.constant 0 : index
    %c0_7 = arith.constant 0 : index
    %9 = vector.load %arg3[%c0_6, %c0_7] : memref<128x128xbf16, #tpu.memory_space<vmem>>, vector<128x128xbf16>
    %c0_8 = arith.constant 0 : index
    %c0_9 = arith.constant 0 : index
    %10 = vector.load %arg4[%c0_8, %c0_9] : memref<1x128xf32, #tpu.memory_space<vmem>>, vector<1x128xf32>
    %11 = arith.truncf %8 : vector<8x128xf32> to vector<8x128xbf16>
    %cst_10 = arith.constant dense<0.000000e+00> : vector<8x128xf32>
    %12 = tpu.matmul %11, %9, %cst_10 {dimension_numbers = #tpu.dot_dimension_numbers<[1], [0], [0], [1], [0, 0, 1, 1], [], []>} : vector<8x128xbf16>, vector<128x128xbf16>, vector<8x128xf32> -> vector<8x128xf32>
    %13 = vector.broadcast %10 : vector<1x128xf32> to vector<8x128xf32>
    %14 = arith.addf %12, %13 : vector<8x128xf32>
    %cst_11 = arith.constant 0.000000e+00 : f32
    %15 = vector.broadcast %cst_11 : f32 to vector<8x128xf32>
    %16 = arith.maximumf %14, %15 : vector<8x128xf32>
    %c0_12 = arith.constant 0 : index
    %c0_13 = arith.constant 0 : index
    %17 = vector.load %arg5[%c0_12, %c0_13] : memref<128x128xbf16, #tpu.memory_space<vmem>>, vector<128x128xbf16>
    %c0_14 = arith.constant 0 : index
    %c0_15 = arith.constant 0 : index
    %18 = vector.load %arg6[%c0_14, %c0_15] : memref<1x128xf32, #tpu.memory_space<vmem>>, vector<1x128xf32>
    %19 = arith.truncf %16 : vector<8x128xf32> to vector<8x128xbf16>
    %cst_16 = arith.constant dense<0.000000e+00> : vector<8x128xf32>
    %20 = tpu.matmul %19, %17, %cst_16 {dimension_numbers = #tpu.dot_dimension_numbers<[1], [0], [0], [1], [0, 0, 1, 1], [], []>} : vector<8x128xbf16>, vector<128x128xbf16>, vector<8x128xf32> -> vector<8x128xf32>
    %21 = vector.broadcast %18 : vector<1x128xf32> to vector<8x128xf32>
    %22 = arith.addf %20, %21 : vector<8x128xf32>
    %c0_17 = arith.constant 0 : index
    %c0_18 = arith.constant 0 : index
    %23 = vector.load %arg7[%c0_17, %c0_18] : memref<8x128xf32, #tpu.memory_space<vmem>>, vector<8x128xf32>
    tpu.vector_store %arg7[%c0_17, %c0_18], %22 {strides = array<i32>} : memref<8x128xf32, #tpu.memory_space<vmem>>, vector<8x128xf32>,
    return
  }
}

</mosaic_0001>

<llo_original>
// kernel: mlp_forward.1
$region0: #{mlp_forward.1}
  #allocation0 [shape = 'u32[]', space=smem, size = 0x4, offset = 0x4, fixed_abs, tag = 'smem constant byte address 0x4 - core index']
  #allocation1 [shape = 'u32[72,128]{1,0:T(1,128)}', space=vmem, size = 0x9000, scoped, tag = 'internal scratch']
  %s0 = inlined_call_operand.vmem [shape: f32[8,128], index: 0, kind: input, shape index: {}]
  %s1 = inlined_call_operand.vmem [shape: bf16[128,128], index: 1, kind: input, shape index: {}]
  %s2 = inlined_call_operand.vmem [shape: f32[1,128], index: 2, kind: input, shape index: {}]
  %s3 = inlined_call_operand.vmem [shape: bf16[128,128], index: 3, kind: input, shape index: {}]
  %s4 = inlined_call_operand.vmem [shape: f32[1,128], index: 4, kind: input, shape index: {}]
  %s5 = inlined_call_operand.vmem [shape: bf16[128,128], index: 5, kind: input, shape index: {}]
  %s6 = inlined_call_operand.vmem [shape: f32[1,128], index: 6, kind: input, shape index: {}]
  %s7 = inlined_call_operand.hbm [shape: f32[8,128], index: 7, kind: output, shape index: {}]
  %s8 = sld [smem:[#allocation0]]
  $region38: #{mlp_forward.1} parent=0
    _
  %s10 = ssub.s32 1, %s8
  %s11 = scalar_select 0, %s10, %s8
  $region1: #{mlp_forward.1} parent=0
    #allocation2 [shape = 'u8[4096]{0}', space=vmem, size = 0x1000, scoped, tag = 'output window, operand 0, single buffered']
    #allocation3 [shape = 's32[1]{0}', space=sflag, size = 0x4, scoped, tag = 'scoped memory for mlp_forward.1']
    %12 = vsyncpa [#allocation3], 0
    // Predicated region
    $region2: #{mlp_forward.1} parent=1 // pred_check
      _
    $region3: #{mlp_forward.1} parent=1 // pred_check_branch
      %14 = sbr.rel (0) target = $region5
    $region4: #{mlp_forward.1} parent=1 // pred_region
      _
    $region5: #{mlp_forward.1} parent=1 // pred_fallthru
      _
    // Predicated region
    $region6: #{mlp_forward.1} parent=1 // pred_check
      _
    $region7: #{mlp_forward.1} parent=1 // pred_check_branch
      %16 = sbr.rel (0) target = $region9
    $region8: #{mlp_forward.1} parent=1 // pred_region
      _
    $region9: #{mlp_forward.1} parent=1 // pred_fallthru
      _
    // Predicated region
    $region10: #{mlp_forward.1} parent=1 // pred_check
      _
    $region11: #{mlp_forward.1} parent=1 // pred_check_branch
      %18 = sbr.rel (0) target = $region13
    $region12: #{mlp_forward.1} parent=1 // pred_region
      _
    $region13: #{mlp_forward.1} parent=1 // pred_fallthru
      _
    // Predicated region
    $region14: #{mlp_forward.1} parent=1 // pred_check
      _
    $region15: #{mlp_forward.1} parent=1 // pred_check_branch
      %20 = sbr.rel (0) target = $region17
    $region16: #{mlp_forward.1} parent=1 // pred_region
      _
    $region17: #{mlp_forward.1} parent=1 // pred_fallthru
      _
    // Predicated region
    $region18: #{mlp_forward.1} parent=1 // pred_check
      _
    $region19: #{mlp_forward.1} parent=1 // pred_check_branch
      %22 = sbr.rel (0) target = $region21
    $region20: #{mlp_forward.1} parent=1 // pred_region
      _
    $region21: #{mlp_forward.1} parent=1 // pred_fallthru
      _
    // Predicated region
    $region22: #{mlp_forward.1} parent=1 // pred_check
      _
    $region23: #{mlp_forward.1} parent=1 // pred_check_branch
      %24 = sbr.rel (0) target = $region25
    $region24: #{mlp_forward.1} parent=1 // pred_region
      _
    $region25: #{mlp_forward.1} parent=1 // pred_fallthru
      _
    // Predicated region
    $region26: #{mlp_forward.1} parent=1 // pred_check
      _
    $region27: #{mlp_forward.1} parent=1 // pred_check_branch
      %26 = sbr.rel (0) target = $region29
    $region28: #{mlp_forward.1} parent=1 // pred_region
      _
    $region29: #{mlp_forward.1} parent=1 // pred_fallthru
      _
    %v27 = vld [vmem:[%s0] sm:$0xff]
    %v28 = vld [vmem:[%s1] sm:$0xf]
    %v29 = vld [vmem:[%s1 + $0x4] sm:$0xf]
    %v30 = vld [vmem:[%s1 + $0x8] sm:$0xf]
    %v31 = vld [vmem:[%s1 + $0xc] sm:$0xf]
    %v32 = vld [vmem:[%s1 + $0x10] sm:$0xf]
    %v33 = vld [vmem:[%s1 + $0x14] sm:$0xf]
    %v34 = vld [vmem:[%s1 + $0x18] sm:$0xf]
    %v35 = vld [vmem:[%s1 + $0x1c] sm:$0xf]
    %v36 = vld [vmem:[%s1 + $0x20] sm:$0xf]
    %v37 = vld [vmem:[%s1 + $0x24] sm:$0xf]
    %v38 = vld [vmem:[%s1 + $0x28] sm:$0xf]
    %v39 = vld [vmem:[%s1 + $0x2c] sm:$0xf]
    %v40 = vld [vmem:[%s1 + $0x30] sm:$0xf]
    %v41 = vld [vmem:[%s1 + $0x34] sm:$0xf]
    %v42 = vld [vmem:[%s1 + $0x38] sm:$0xf]
    %v43 = vld [vmem:[%s1 + $0x3c] sm:$0xf]
    %v44 = vld [vmem:[%s2] sm:$0x1]
    %v45 = vpack.c.bf16 %v27, %v27
    %v47 = vperm.slane %v44, 0
    %v65 = vunpack.c.l.b16 %v28
    %v66 = vunpack.c.l.b16 %v29
    %v67 = vunpack.c.l.b16 %v30
    %v68 = vunpack.c.l.b16 %v31
    %v69 = vunpack.c.l.b16 %v32
    %v70 = vunpack.c.l.b16 %v33
    %v71 = vunpack.c.l.b16 %v34
    %v72 = vunpack.c.l.b16 %v35
    %v73 = vunpack.c.l.b16 %v36
    %v74 = vunpack.c.l.b16 %v37
    %v75 = vunpack.c.l.b16 %v38
    %v76 = vunpack.c.l.b16 %v39
    %v77 = vunpack.c.l.b16 %v40
    %v78 = vunpack.c.l.b16 %v41
    %v79 = vunpack.c.l.b16 %v42
    %v80 = vunpack.c.l.b16 %v43
    %v81 = vpack.c.b16 %v66, %v65
    %v82 = vpack.c.b16 %v68, %v67
    %v83 = vpack.c.b16 %v70, %v69
    %v84 = vpack.c.b16 %v72, %v71
    %v85 = vpack.c.b16 %v74, %v73
    %v86 = vpack.c.b16 %v76, %v75
    %v87 = vpack.c.b16 %v78, %v77
    %v88 = vpack.c.b16 %v80, %v79
    %97 = vmatpush.bf16.msra.mxu0 %v88
    %98 = vmatpush.bf16.msra.mxu0 %v87
    %99 = vmatpush.bf16.msra.mxu0 %v86
    %100 = vmatpush.bf16.msra.mxu0 %v85
    %101 = vmatpush.bf16.msra.mxu0 %v84
    %102 = vmatpush.bf16.msra.mxu0 %v83
    %103 = vmatpush.bf16.msra.mxu0 %v82
    %104 = vmatpush.bf16.msra.mxu0 %v81
    %105 = vmatmul.bf16.gmra.mxu0 %v45
    %v106 = vpop.f32.mrf.mxu0
    %v107 = vadd.f32 %v47, %v106
    %v108 = vpop.f32.mrf.mxu0
    %109 = vdwg.mxu0
    %v110 = vmax.f32 %v107, 0.0
    %v111 = vld [vmem:[%s3] sm:$0xf]
    %v112 = vld [vmem:[%s3 + $0x4] sm:$0xf]
    %v113 = vld [vmem:[%s3 + $0x8] sm:$0xf]
    %v114 = vld [vmem:[%s3 + $0xc] sm:$0xf]
    %v115 = vld [vmem:[%s3 + $0x10] sm:$0xf]
    %v116 = vld [vmem:[%s3 + $0x14] sm:$0xf]
    %v117 = vld [vmem:[%s3 + $0x18] sm:$0xf]
    %v118 = vld [vmem:[%s3 + $0x1c] sm:$0xf]
    %v119 = vld [vmem:[%s3 + $0x20] sm:$0xf]
    %v120 = vld [vmem:[%s3 + $0x24] sm:$0xf]
    %v121 = vld [vmem:[%s3 + $0x28] sm:$0xf]
    %v122 = vld [vmem:[%s3 + $0x2c] sm:$0xf]
    %v123 = vld [vmem:[%s3 + $0x30] sm:$0xf]
    %v124 = vld [vmem:[%s3 + $0x34] sm:$0xf]
    %v125 = vld [vmem:[%s3 + $0x38] sm:$0xf]
    %v126 = vld [vmem:[%s3 + $0x3c] sm:$0xf]
    %v127 = vld [vmem:[%s4] sm:$0x1]
    %v128 = vpack.c.bf16 %v110, %v110
    %v130 = vperm.slane %v127, 0
    %v148 = vunpack.c.l.b16 %v111
    %v149 = vunpack.c.l.b16 %v112
    %v150 = vunpack.c.l.b16 %v113
    %v151 = vunpack.c.l.b16 %v114
    %v152 = vunpack.c.l.b16 %v115
    %v153 = vunpack.c.l.b16 %v116
    %v154 = vunpack.c.l.b16 %v117
    %v155 = vunpack.c.l.b16 %v118
    %v156 = vunpack.c.l.b16 %v119
    %v157 = vunpack.c.l.b16 %v120
    %v158 = vunpack.c.l.b16 %v121
    %v159 = vunpack.c.l.b16 %v122
    %v160 = vunpack.c.l.b16 %v123
    %v161 = vunpack.c.l.b16 %v124
    %v162 = vunpack.c.l.b16 %v125
    %v163 = vunpack.c.l.b16 %v126
    %v164 = vpack.c.b16 %v149, %v148
    %v165 = vpack.c.b16 %v151, %v150
    %v166 = vpack.c.b16 %v153, %v152
    %v167 = vpack.c.b16 %v155, %v154
    %v168 = vpack.c.b16 %v157, %v156
    %v169 = vpack.c.b16 %v159, %v158
    %v170 = vpack.c.b16 %v161, %v160
    %v171 = vpack.c.b16 %v163, %v162
    %180 = vmatpush.bf16.msra.mxu0 %v171
    %181 = vmatpush.bf16.msra.mxu0 %v170
    %182 = vmatpush.bf16.msra.mxu0 %v169
    %183 = vmatpush.bf16.msra.mxu0 %v168
    %184 = vmatpush.bf16.msra.mxu0 %v167
    %185 = vmatpush.bf16.msra.mxu0 %v166
    %186 = vmatpush.bf16.msra.mxu0 %v165
    %187 = vmatpush.bf16.msra.mxu0 %v164
    %188 = vmatmul.bf16.gmra.mxu0 %v128
    %v189 = vpop.f32.mrf.mxu0
    %v190 = vadd.f32 %v130, %v189
    %v191 = vpop.f32.mrf.mxu0
    %192 = vdwg.mxu0
    %v193 = vmax.f32 %v190, 0.0
    %v194 = vld [vmem:[%s5] sm:$0xf]
    %v195 = vld [vmem:[%s5 + $0x4] sm:$0xf]
    %v196 = vld [vmem:[%s5 + $0x8] sm:$0xf]
    %v197 = vld [vmem:[%s5 + $0xc] sm:$0xf]
    %v198 = vld [vmem:[%s5 + $0x10] sm:$0xf]
    %v199 = vld [vmem:[%s5 + $0x14] sm:$0xf]
    %v200 = vld [vmem:[%s5 + $0x18] sm:$0xf]
    %v201 = vld [vmem:[%s5 + $0x1c] sm:$0xf]
    %v202 = vld [vmem:[%s5 + $0x20] sm:$0xf]
    %v203 = vld [vmem:[%s5 + $0x24] sm:$0xf]
    %v204 = vld [vmem:[%s5 + $0x28] sm:$0xf]
    %v205 = vld [vmem:[%s5 + $0x2c] sm:$0xf]
    %v206 = vld [vmem:[%s5 + $0x30] sm:$0xf]
    %v207 = vld [vmem:[%s5 + $0x34] sm:$0xf]
    %v208 = vld [vmem:[%s5 + $0x38] sm:$0xf]
    %v209 = vld [vmem:[%s5 + $0x3c] sm:$0xf]
    %v210 = vld [vmem:[%s6] sm:$0x1]
    %v211 = vpack.c.bf16 %v193, %v193
    %v213 = vperm.slane %v210, 0
    %v231 = vunpack.c.l.b16 %v194
    %v232 = vunpack.c.l.b16 %v195
    %v233 = vunpack.c.l.b16 %v196
    %v234 = vunpack.c.l.b16 %v197
    %v235 = vunpack.c.l.b16 %v198
    %v236 = vunpack.c.l.b16 %v199
    %v237 = vunpack.c.l.b16 %v200
    %v238 = vunpack.c.l.b16 %v201
    %v239 = vunpack.c.l.b16 %v202
    %v240 = vunpack.c.l.b16 %v203
    %v241 = vunpack.c.l.b16 %v204
    %v242 = vunpack.c.l.b16 %v205
    %v243 = vunpack.c.l.b16 %v206
    %v244 = vunpack.c.l.b16 %v207
    %v245 = vunpack.c.l.b16 %v208
    %v246 = vunpack.c.l.b16 %v209
    %v247 = vpack.c.b16 %v232, %v231
    %v248 = vpack.c.b16 %v234, %v233
    %v249 = vpack.c.b16 %v236, %v235
    %v250 = vpack.c.b16 %v238, %v237
    %v251 = vpack.c.b16 %v240, %v239
    %v252 = vpack.c.b16 %v242, %v241
    %v253 = vpack.c.b16 %v244, %v243
    %v254 = vpack.c.b16 %v246, %v245
    %263 = vmatpush.bf16.msra.mxu0 %v254
    %264 = vmatpush.bf16.msra.mxu0 %v253
    %265 = vmatpush.bf16.msra.mxu0 %v252
    %266 = vmatpush.bf16.msra.mxu0 %v251
    %267 = vmatpush.bf16.msra.mxu0 %v250
    %268 = vmatpush.bf16.msra.mxu0 %v249
    %269 = vmatpush.bf16.msra.mxu0 %v248
    %270 = vmatpush.bf16.msra.mxu0 %v247
    %271 = vmatmul.bf16.gmra.mxu0 %v211
    %v272 = vpop.f32.mrf.mxu0
    %v273 = vadd.f32 %v213, %v272
    %v274 = vpop.f32.mrf.mxu0
    %275 = vdwg.mxu0
    %276 = vst [vmem:[#allocation2] sm:$0xff] %v273
    // Predicated region
    $region30: #{mlp_forward.1} parent=1 // pred_check
      _
    $region31: #{mlp_forward.1} parent=1 // pred_check_branch
      %278 = sbr.rel (0) target = $region33
    $region32: #{mlp_forward.1} parent=1 // pred_region
      %280 = vsyncadd [#allocation3], 0
      %s282 = sshll.u32 [#allocation2], 4
      %s283 = int_to_ptr.vmem [resolvable:$true] %s282
      %s284 = sshll.u32 %s7, 4
      %s285 = int_to_ptr.hbm [resolvable:$true] %s284
      %287 = dma.vmem_to_hbm [thread:$0]  %s283, 128, %s285, [#allocation3]
    $region33: #{mlp_forward.1} parent=1 // pred_fallthru
      _
    // Predicated region
    $region34: #{mlp_forward.1} parent=1 // pred_check
      _
    $region35: #{mlp_forward.1} parent=1 // pred_check_branch
      %289 = sbr.rel (0) target = $region37
    $region36: #{mlp_forward.1} parent=1 // pred_region
      %291 = dma.done [#allocation3], 128
    $region37: #{mlp_forward.1} parent=1 // pred_fallthru
      _
    %292 = vsyncpa [#allocation3], 1

</llo_original>
